<compile_context>
chip_gen: v7x
topology: tpu7x:2x2x1
jax: 0.10.0
libtpu: 0.0.40
codegen_flags: <defaults>
</compile_context>

<pallas_src>
import functools

import jax
import jax.numpy as jnp
from jax import lax
from jax.experimental import pallas as pl
from jax.experimental.pallas import tpu as pltpu

_SCOPED_VMEM_CAP = 32 << 20   # safe on v5e/v6e (128 MiB phys) and v7x (64 MiB phys / 32 MiB scoped)
_RESIDENT_W_CAP = 8 << 20     # conservative resident-weight cap vs v7x's smaller VMEM


def _cdiv(a, b):
    return (a + b - 1) // b


def _round_up(x, m):
    return _cdiv(x, m) * m


def _sublane(dtype):
    return {4: 8, 2: 16, 1: 32}[jnp.dtype(dtype).itemsize]


def _pick_tile(padded_dim, max_tile):
    """Largest 128-multiple that divides `padded_dim` (itself a 128-multiple) and is <= max_tile."""
    q = padded_dim // 128
    best, f = 1, 1
    while f * 128 <= max_tile and f <= q:
        if q % f == 0:
            best = f
        f += 1
    return best * 128


# --------------------------------------------------------------------------
# Fast path: weight + bias resident in VMEM, single streaming pass over x.
# --------------------------------------------------------------------------
def _resident_kernel(x_ref, w_ref, b_ref, o_ref, *, scale):
    # bf16 operands -> MXU at full rate; accumulate in f32.
    x = x_ref[...].astype(jnp.bfloat16)          # (tm, ins)
    w = w_ref[...].astype(jnp.bfloat16)          # (outs, ins), resident
    acc = lax.dot_general(
        x, w,
        dimension_numbers=(((1,), (1,)), ((), ())),
        preferred_element_type=jnp.float32,
    )
    # Equalised-LR scale + bias fused into the f32 epilogue.
    o_ref[...] = (acc * scale + b_ref[...].astype(jnp.float32)).astype(o_ref.dtype)


def _fast_path(x2d, w, b2d, scale, out_dtype):
    M, ins = x2d.shape
    outs = w.shape[0]
    s = _sublane(x2d.dtype)
    xb = jnp.dtype(x2d.dtype).itemsize
    wb = jnp.dtype(w.dtype).itemsize
    ob = jnp.dtype(out_dtype).itemsize

    resident = outs * ins * wb + outs * 4

    def est(tm):
        return resident + 2 * tm * ins * xb + 2 * tm * outs * ob

    tm = min(512, _round_up(M, s))
    while tm > s and est(tm) > (24 << 20):
        tm = _round_up(max(s, tm // 2), s)
    # v7x megacore: give both TensorCores at least one M block when possible.
    if _cdiv(M, tm) < 2 and M > s:
        tm = _round_up(_cdiv(M, 2), s)

    grid = (_cdiv(M, tm),)
    vmem_limit = int(min(_SCOPED_VMEM_CAP, max(16 << 20, est(tm) + (4 << 20))))

    cost = pl.CostEstimate(
        flops=2 * M * outs * ins,
        transcendentals=0,
        bytes_accessed=int(M * ins * xb + outs * ins * wb + M * outs * ob + outs * 4),
    )

    return pl.pallas_call(
        functools.partial(_resident_kernel, scale=scale),
        out_shape=jax.ShapeDtypeStruct((M, outs), out_dtype),
        grid_spec=pltpu.PrefetchScalarGridSpec(
            num_scalar_prefetch=0,
            grid=grid,
            in_specs=[
                pl.BlockSpec((tm, ins), lambda i: (i, 0)),    # x: one streaming pass
                pl.BlockSpec((outs, ins), lambda i: (0, 0)),  # w: fetched once, VMEM-resident
                pl.BlockSpec((1, outs), lambda i: (0, 0)),    # bias: VMEM-resident
            ],
            out_specs=pl.BlockSpec((tm, outs), lambda i: (i, 0)),
        ),
        compiler_params=pltpu.CompilerParams(
            dimension_semantics=("parallel",),
            vmem_limit_bytes=vmem_limit,
        ),
        cost_estimate=cost,
    )(x2d, w, b2d)


# --------------------------------------------------------------------------
# Fallback: 3-D tiled matmul for weights too large to keep resident.
# --------------------------------------------------------------------------
def _tiled_kernel(x_ref, w_ref, b_ref, o_ref, acc_ref, *, scale, ins, tk, mask_k):
    k = pl.program_id(2)

    @pl.when(k == 0)
    def _():
        acc_ref[...] = jnp.zeros_like(acc_ref)

    x = x_ref[...]
    if mask_k:
        # x is NOT padded in the wrapper; zero the K remainder so garbage from
        # the partially out-of-bounds last K block (possibly NaN) can never
        # reach the accumulator (w's padded columns are zero, but 0*NaN != 0).
        col = k * tk + lax.broadcasted_iota(jnp.int32, x.shape, 1)
        x = jnp.where(col < ins, x, jnp.zeros_like(x))

    acc_ref[...] += lax.dot_general(
        x.astype(jnp.bfloat16), w_ref[...].astype(jnp.bfloat16),
        dimension_numbers=(((1,), (1,)), ((), ())),
        preferred_element_type=jnp.float32,
    )

    @pl.when(k == pl.num_programs(2) - 1)
    def _():
        o_ref[...] = (acc_ref[...] * scale
                      + b_ref[...].astype(jnp.float32)).astype(o_ref.dtype)


def _tiled_path(x2d, w, bias, scale, out_dtype):
    M, ins = x2d.shape
    outs = w.shape[0]
    s = _sublane(x2d.dtype)
    xb = jnp.dtype(x2d.dtype).itemsize
    wb = jnp.dtype(w.dtype).itemsize
    ob = jnp.dtype(out_dtype).itemsize

    # Pad only to 128 multiples; tiles divide the padded dims exactly.
    Kp = _round_up(ins, 128)
    Np = _round_up(outs, 128)
    tk = _pick_tile(Kp, 1024)
    tn = _pick_tile(Np, 512)
    tm = min(512, _round_up(M, s))
    if _cdiv(M, tm) < 2 and M > s:
        tm = _round_up(_cdiv(M, 2), s)

    # Only the (small) weight / bias are padded; x is never copied.
    wp = jnp.pad(w, ((0, Np - outs), (0, Kp - ins))) if (Np != outs or Kp != ins) else w
    bp = (jnp.pad(bias, (0, Np - outs)) if Np != outs else bias).reshape(1, Np)

    grid = (_cdiv(M, tm), Np // tn, Kp // tk)
    mask_k = Kp > ins

    est = (2 * tm * tk * xb + 2 * tn * tk * wb + 2 * tn * 4
           + 2 * tm * tn * ob + tm * tn * 4)
    vmem_limit = int(min(_SCOPED_VMEM_CAP, max(16 << 20, est + (4 << 20))))

    cost = pl.CostEstimate(
        flops=2 * M * Np * Kp,
        transcendentals=0,
        bytes_accessed=int(grid[1] * M * ins * xb + grid[0] * Np * Kp * wb
                           + M * outs * ob + Np * 4),
    )

    return pl.pallas_call(
        functools.partial(_tiled_kernel, scale=scale, ins=ins, tk=tk, mask_k=mask_k),
        out_shape=jax.ShapeDtypeStruct((M, outs), out_dtype),
        grid_spec=pltpu.PrefetchScalarGridSpec(
            num_scalar_prefetch=0,
            grid=grid,
            in_specs=[
                pl.BlockSpec((tm, tk), lambda i, j, k: (i, k)),  # x tile (unpadded; K edge masked in-kernel)
                pl.BlockSpec((tn, tk), lambda i, j, k: (j, k)),  # w tile (PyTorch (outs, ins) layout)
                pl.BlockSpec((1, tn), lambda i, j, k: (0, j)),   # bias tile
            ],
            out_specs=pl.BlockSpec((tm, tn), lambda i, j, k: (i, j)),
            scratch_shapes=[pltpu.VMEM((tm, tn), jnp.float32)],
        ),
        compiler_params=pltpu.CompilerParams(
            dimension_semantics=("parallel", "parallel", "arbitrary"),
            vmem_limit_bytes=vmem_limit,
        ),
        cost_estimate=cost,
    )(x2d, wp, bp)


def wscaled_linear(x, w, bias, *, lr_mul=1.0, force_tiled=False):
    """y = x @ (w * scale).T + bias, scale = sqrt(2/ins) * lr_mul.

    x: (..., ins); w: (outs, ins); bias: (outs,). Leading dims are flattened.
    """
    orig_shape = x.shape
    ins = orig_shape[-1]
    outs = w.shape[0]
    scale = (2.0 / ins) ** 0.5 * lr_mul
    x2d = x.reshape(-1, ins)
    out_dtype = x.dtype

    w_bytes = outs * ins * jnp.dtype(w.dtype).itemsize
    if (not force_tiled) and w_bytes <= _RESIDENT_W_CAP:
        out = _fast_path(x2d, w, bias.reshape(1, outs), scale, out_dtype)
    else:
        out = _tiled_path(x2d, w, bias, scale, out_dtype)
    return out.reshape(*orig_shape[:-1], outs)


if __name__ == "__main__":
    key = jax.random.PRNGKey(0)
    k_x, k_w, k_b = jax.random.split(key, 3)

    # Small shapes consistent with the module: per-pixel linear over the last
    # (channel / hidden) dim of a (batch, H, W, ins) feature map.
    batch, H, W, ins, outs, lr_mul = 2, 4, 8, 32, 64, 1.0

    x = jax.random.normal(k_x, (batch, H, W, ins), dtype=jnp.float32)
    w = jax.random.normal(k_w, (outs, ins), dtype=jnp.float32)        # torch.randn(outs, ins)
    bias = 0.1 * jax.random.normal(k_b, (outs,), dtype=jnp.float32)   # exercise the bias add

    y_fast = jax.block_until_ready(wscaled_linear(x, w, bias, lr_mul=lr_mul))
    y_tiled = jax.block_until_ready(
        wscaled_linear(x, w, bias, lr_mul=lr_mul, force_tiled=True))

    # References: one matching the kernel's bf16 MXU operands exactly, one in
    # full f32 precision (looser tolerance, bf16-class accuracy expected).
    scale = (2.0 / ins) ** 0.5 * lr_mul
    x2d = x.reshape(-1, ins)
    ref_bf16 = (jnp.dot(x2d.astype(jnp.bfloat16), w.astype(jnp.bfloat16).T,
                        preferred_element_type=jnp.float32) * scale
                + bias).reshape(batch, H, W, outs)
    ref_f32 = (jnp.dot(x2d, (w * scale).T, precision=lax.Precision.HIGHEST)
               + bias).reshape(batch, H, W, outs)

    for name, y in (("fast", y_fast), ("tiled", y_tiled)):
        assert y.shape == (batch, H, W, outs), name
        assert jnp.allclose(y, ref_bf16, atol=2e-3, rtol=2e-3), f"{name}: mismatch vs bf16 ref"
        assert jnp.allclose(y, ref_f32, atol=1e-1, rtol=1e-1), f"{name}: mismatch vs f32 ref"

    print("KERNEL_OK")
</pallas_src>

<mosaic_0001>
module attributes {stable_mosaic.version = 11 : i64} {
  func.func @_resident_kernel(%arg0: i32, %arg1: memref<32x32xf32, #tpu.memory_space<vmem>>, %arg2: memref<64x32xf32, #tpu.memory_space<vmem>>, %arg3: memref<1x64xf32, #tpu.memory_space<vmem>>, %arg4: memref<32x64xf32, #tpu.memory_space<vmem>>) attributes {dimension_semantics = [#tpu.dimension_semantics<parallel>], iteration_bounds = array<i64: 2>, scalar_prefetch = 0 : i64, scratch_operands = 0 : i64, tpu.core_type = #tpu.core_type<tc>, window_params = [{transform_indices = @transform_0, window_bounds = array<i64: 32, 32>}, {pipeline_mode = #tpu.pipeline_mode<synchronous>, transform_indices = @transform_1, window_bounds = array<i64: 64, 32>}, {pipeline_mode = #tpu.pipeline_mode<synchronous>, transform_indices = @transform_2, window_bounds = array<i64: 1, 64>}, {transform_indices = @transform_3, window_bounds = array<i64: 32, 64>}]} {
    %c0 = arith.constant 0 : index
    %c0_0 = arith.constant 0 : index
    %0 = vector.load %arg1[%c0, %c0_0] : memref<32x32xf32, #tpu.memory_space<vmem>>, vector<32x32xf32>
    %1 = arith.truncf %0 : vector<32x32xf32> to vector<32x32xbf16>
    %c0_1 = arith.constant 0 : index
    %c0_2 = arith.constant 0 : index
    %2 = vector.load %arg2[%c0_1, %c0_2] : memref<64x32xf32, #tpu.memory_space<vmem>>, vector<64x32xf32>
    %3 = arith.truncf %2 : vector<64x32xf32> to vector<64x32xbf16>
    %cst = arith.constant dense<0.000000e+00> : vector<32x64xf32>
    %4 = tpu.matmul %1, %3, %cst {dimension_numbers = #tpu.dot_dimension_numbers<[1], [1], [0], [0], [0, 0, 1, 0], [], []>} : vector<32x32xbf16>, vector<64x32xbf16>, vector<32x64xf32> -> vector<32x64xf32>
    %cst_3 = arith.constant 2.500000e-01 : f32
    %5 = vector.broadcast %cst_3 : f32 to vector<32x64xf32>
    %6 = arith.mulf %4, %5 : vector<32x64xf32>
    %c0_4 = arith.constant 0 : index
    %c0_5 = arith.constant 0 : index
    %7 = vector.load %arg3[%c0_4, %c0_5] : memref<1x64xf32, #tpu.memory_space<vmem>>, vector<1x64xf32>
    %8 = vector.broadcast %7 : vector<1x64xf32> to vector<32x64xf32>
    %9 = arith.addf %6, %8 : vector<32x64xf32>
    %c0_6 = arith.constant 0 : index
    %c0_7 = arith.constant 0 : index
    %10 = vector.load %arg4[%c0_6, %c0_7] : memref<32x64xf32, #tpu.memory_space<vmem>>, vector<32x64xf32>
    tpu.vector_store %arg4[%c0_6, %c0_7], %9 {strides = array<i32>} : memref<32x64xf32, #tpu.memory_space<vmem>>, vector<32x64xf32>,
    return
  }
  func.func @transform_0(%arg0: i32) -> (i32, i32) {
    %c0_i32 = arith.constant 0 : i32
    %c0_i32_0 = arith.constant 0 : i32
    return %arg0, %c0_i32 : i32, i32
  }
  func.func @transform_1(%arg0: i32) -> (i32, i32) {
    %c0_i32 = arith.constant 0 : i32
    %c0_i32_0 = arith.constant 0 : i32
    %c0_i32_1 = arith.constant 0 : i32
    return %c0_i32, %c0_i32_0 : i32, i32
  }
  func.func @transform_2(%arg0: i32) -> (i32, i32) {
    %c0_i32 = arith.constant 0 : i32
    %c0_i32_0 = arith.constant 0 : i32
    %c0_i32_1 = arith.constant 0 : i32
    return %c0_i32, %c0_i32_0 : i32, i32
  }
  func.func @transform_3(%arg0: i32) -> (i32, i32) {
    %c0_i32 = arith.constant 0 : i32
    %c0_i32_0 = arith.constant 0 : i32
    return %arg0, %c0_i32 : i32, i32
  }
}

</mosaic_0001>

<llo_original>
// kernel: tpu_custom_call.1
$region0: #{tpu_custom_call.1}
  #allocation0 [shape = 'u32[]', space=smem, size = 0x4, offset = 0x4, fixed_abs, tag = 'smem constant byte address 0x4 - core index']
  #allocation1 [shape = 'u32[144,128]{1,0:T(1,128)}', space=vmem, size = 0x12000, scoped, tag = 'internal scratch']
  %s0 = inlined_call_operand.vmem [shape: f32[64,32], index: 0, kind: input, shape index: {}]
  %s1 = inlined_call_operand.vmem [shape: f32[64,32], index: 1, kind: input, shape index: {}]
  %s2 = inlined_call_operand.vmem [shape: f32[1,64], index: 2, kind: input, shape index: {}]
  %s3 = inlined_call_operand.hbm [shape: f32[64,64], index: 3, kind: output, shape index: {}]
  %s4 = sld [smem:[#allocation0]]
  $region45: #{tpu_custom_call.1} parent=0
    _
  %s6 = ssub.s32 1, %s4
  %s7 = scalar_select 0, %s6, %s4
  $region1: #{tpu_custom_call.1} parent=0
    #allocation2 [shape = 'u8[32768]{0}', space=vmem, size = 0x8000, scoped, tag = 'output window, operand 0']
    #allocation3 [shape = 's32[2]{0}', space=sflag, size = 0x8, scoped, tag = 'scoped memory for tpu_custom_call.1']
    %8 = vsyncpa [#allocation3], 0
    %s9 = scalar_lea.sflag [#allocation3], 1
    %10 = vsyncpa %s9, 0
    loop: start=0, step=1, limit=4
    $region2: #{tpu_custom_call.1} parent=1 // loop_pre_header
      _
    $region3: #{tpu_custom_call.1} parent=1 // loop_header
      %s12 = sphi 0, %s16
      %p13 = scmp.ge.s32.totalorder %s12, 4
      %s22 = sphi 0, %s24
      %s25 = sphi 0, %s22
      %s26 = sphi 0, %s25
      %s42 = sphi 0, %s26
      %s46 = sphi 0, %s46
      %s48 = sphi 0, %s46
      %s49 = sphi 0, %s48
      %s63 = sphi 0, %s49
      %s67 = sphi 0, %s67
      %s69 = sphi 0, %s67
      %s70 = sphi 0, %s69
      %s84 = sphi 0, %s70
      %s90 = sphi 0, %s92
      %s93 = sphi 0, %s90
      %s94 = sphi 0, %s93
      %s110 = sphi 0, %s94
    $region4: #{tpu_custom_call.1} parent=1 // loop_header_branch
      %15 = sbr.rel (%p13) target = $region8
    $region5: #{tpu_custom_call.1} parent=1 // loop_body
      %s17 = ssub.s32 %s12, 1
      %s18 = ssub.s32 %s12, 2
      %s19 = sadd.s32 %s12, 1
      %s20 = ssub.s32 %s12, %s19
      %p21 = scmp.eq.s32.totalorder %s20, 0
      %s23 = sadd.s32 %s22, 1
      %s24 = scalar_select %p21, %s22, %s23
      %p27 = pneg %p21
      %p28 = scmp.eq.s32.totalorder %s12, 1
      %p29 = por %p27, %p28
      %p30 = scmp.ne.s32.totalorder %s22, %s25
      %p31 = scmp.eq.s32.totalorder %s12, 0
      %p32 = por %p30, %p31
      %p33 = scmp.ne.s32.totalorder %s22, %s25
      %p34 = scmp.eq.s32.totalorder %s17, 1
      %p35 = por %p33, %p34
      %p36 = scmp.ne.s32.totalorder %s25, %s26
      %p37 = scmp.eq.s32.totalorder %s17, 0
      %p38 = por %p36, %p37
      %p39 = scmp.ne.s32.totalorder %s25, %s26
      %p40 = scmp.eq.s32.totalorder %s18, 1
      %p41 = por %p39, %p40
      %p43 = scmp.ne.s32.totalorder %s26, %s42
      %p44 = scmp.eq.s32.totalorder %s18, 0
      %p45 = por %p43, %p44
      %s47 = sadd.s32 %s46, 1
      %p50 = scmp.eq.s32.totalorder %s12, 1
      %p51 = scmp.ne.s32.totalorder %s46, %s48
      %p52 = scmp.eq.s32.totalorder %s12, 0
      %p53 = por %p51, %p52
      %p54 = scmp.ne.s32.totalorder %s46, %s48
      %p55 = scmp.eq.s32.totalorder %s17, 1
      %p56 = por %p54, %p55
      %p57 = scmp.ne.s32.totalorder %s48, %s49
      %p58 = scmp.eq.s32.totalorder %s17, 0
      %p59 = por %p57, %p58
      %p60 = scmp.ne.s32.totalorder %s48, %s49
      %p61 = scmp.eq.s32.totalorder %s18, 1
      %p62 = por %p60, %p61
      %p64 = scmp.ne.s32.totalorder %s49, %s63
      %p65 = scmp.eq.s32.totalorder %s18, 0
      %p66 = por %p64, %p65
      %s68 = sadd.s32 %s67, 1
      %p71 = scmp.eq.s32.totalorder %s12, 1
      %p72 = scmp.ne.s32.totalorder %s67, %s69
      %p73 = scmp.eq.s32.totalorder %s12, 0
      %p74 = por %p72, %p73
      %p75 = scmp.ne.s32.totalorder %s67, %s69
      %p76 = scmp.eq.s32.totalorder %s17, 1
      %p77 = por %p75, %p76
      %p78 = scmp.ne.s32.totalorder %s69, %s70
      %p79 = scmp.eq.s32.totalorder %s17, 0
      %p80 = por %p78, %p79
      %p81 = scmp.ne.s32.totalorder %s69, %s70
      %p82 = scmp.eq.s32.totalorder %s18, 1
      %p83 = por %p81, %p82
      %p85 = scmp.ne.s32.totalorder %s70, %s84
      %p86 = scmp.eq.s32.totalorder %s18, 0
      %p87 = por %p85, %p86
      %s88 = ssub.s32 %s12, %s19
      %p89 = scmp.eq.s32.totalorder %s88, 0
      %s91 = sadd.s32 %s90, 1
      %s92 = scalar_select %p89, %s90, %s91
      %p95 = pneg %p89
      %p96 = scmp.eq.s32.totalorder %s12, 1
      %p97 = por %p95, %p96
      %p98 = scmp.ne.s32.totalorder %s90, %s93
      %p99 = scmp.eq.s32.totalorder %s12, 0
      %p100 = por %p98, %p99
      %p101 = scmp.ne.s32.totalorder %s90, %s93
      %p102 = scmp.eq.s32.totalorder %s17, 1
      %p103 = por %p101, %p102
      %p104 = scmp.ne.s32.totalorder %s93, %s94
      %p105 = scmp.eq.s32.totalorder %s17, 0
      %p106 = por %p104, %p105
      %p107 = scmp.ne.s32.totalorder %s93, %s94
      %p108 = scmp.eq.s32.totalorder %s18, 1
      %p109 = por %p107, %p108
      %p111 = scmp.ne.s32.totalorder %s94, %s110
      %p112 = scmp.eq.s32.totalorder %s18, 0
      %p113 = por %p111, %p112
      %p114 = scmp.le.s32.totalorder 1, %s12
      %p115 = scmp.lt.s32.totalorder %s12, 3
      %p116 = pnand %p114, %p115
      %p117 = pneg %p116
      // Predicated region
      $region9: #{tpu_custom_call.1} parent=5 // pred_check
        _
      $region10: #{tpu_custom_call.1} parent=5 // pred_check_branch
        %119 = sbr.rel (%p116) target = $region12
      $region11: #{tpu_custom_call.1} parent=5 // pred_region
        %s120 = ssub.s32 %s12, 1
        // Predicated region
        $region13: #{tpu_custom_call.1} parent=11 // pred_check
          %p121 = pneg %p59
        $region14: #{tpu_custom_call.1} parent=11 // pred_check_branch
          %123 = sbr.rel (%p121) target = $region16
        $region15: #{tpu_custom_call.1} parent=11 // pred_region
          _
        $region16: #{tpu_custom_call.1} parent=11 // pred_fallthru
          _
        // Predicated region
        $region17: #{tpu_custom_call.1} parent=11 // pred_check
          %p124 = pneg %p80
        $region18: #{tpu_custom_call.1} parent=11 // pred_check_branch
          %126 = sbr.rel (%p124) target = $region20
        $region19: #{tpu_custom_call.1} parent=11 // pred_region
          _
        $region20: #{tpu_custom_call.1} parent=11 // pred_fallthru
          _
      $region12: #{tpu_custom_call.1} parent=5 // pred_fallthru
        _
      %p127 = scmp.lt.s32.totalorder %s12, 2
      // Predicated region
      $region21: #{tpu_custom_call.1} parent=5 // pred_check
        %p128 = pneg %p127
      $region22: #{tpu_custom_call.1} parent=5 // pred_check_branch
        %130 = sbr.rel (%p128) target = $region24
      $region23: #{tpu_custom_call.1} parent=5 // pred_region
        // Predicated region
        $region25: #{tpu_custom_call.1} parent=23 // pred_check
          %p131 = pneg %p32
        $region26: #{tpu_custom_call.1} parent=23 // pred_check_branch
          %133 = sbr.rel (%p131) target = $region28
        $region27: #{tpu_custom_call.1} parent=23 // pred_region
          %s134 = smul.u32 4, %s12
          %p135 = scmp.lt.s32.totalorder %s134, 7
          %s136 = scalar_select %p135, %s134, 7
          %s137 = smul.addr %s136, 8
          %s138 = scalar_lea.vmem %s0, %s137
          %s139 = smul.u32 4, %s12
        $region28: #{tpu_custom_call.1} parent=23 // pred_fallthru
          _
      $region24: #{tpu_custom_call.1} parent=5 // pred_fallthru
        _
      %p140 = scmp.le.s32.totalorder 1, %s12
      %p141 = scmp.lt.s32.totalorder %s12, 3
      %p142 = pnand %p140, %p141
      %p143 = pneg %p142
      // Predicated region
      $region29: #{tpu_custom_call.1} parent=5 // pred_check
        _
      $region30: #{tpu_custom_call.1} parent=5 // pred_check_branch
        %145 = sbr.rel (%p142) target = $region32
      $region31: #{tpu_custom_call.1} parent=5 // pred_region
        %s146 = ssub.s32 %s12, 1
        %s147 = smul.u32 4, %s17
        %p148 = scmp.lt.s32.totalorder %s147, 7
        %s149 = scalar_select %p148, %s147, 7
        %s150 = smul.addr %s149, 8
        %s151 = scalar_lea.vmem %s0, %s150
        %p152 = pneg %p38
        %p153 = pneg %p35
        %p154 = pneg %p59
        %p155 = pneg %p56
        %p156 = pneg %p80
        %p157 = pneg %p77
        %p158 = pneg %p106
        %p159 = pneg %p103
        %s160 = sand.u32 %s93, 1
        %s161 = scalar_lea.sflag [#allocation3], %s160
        %s162 = sand.u32 %s93, 1
        %s163 = smul.addr %s162, 32
        %s164 = scalar_lea.vmem [#allocation2], %s163
        %s165 = smul.u32 4, %s17
        %p166 = scmp.lt.s32.totalorder %s165, 7
        %s167 = scalar_select %p166, %s165, 7
        %s168 = smul.addr %s167, 8
        %s169 = scalar_lea.vmem %s0, %s168
        %s170 = smul.u32 4, %s17
        %s171 = smul.u32 4, %s17
        %v173 = vld [vmem:[%s169] sm:$0xff]
        %v174 = vld [vmem:[%s169 + $0x8] sm:$0xff]
        %v175 = vld [vmem:[%s169 + $0x10] sm:$0xff]
        %v176 = vld [vmem:[%s169 + $0x18] sm:$0xff]
        %v177 = vpack.c.bf16 %v174, %v173
        %v178 = vpack.c.bf16 %v176, %v175
        %v179 = vld [vmem:[%s1] sm:$0xff]
        %v180 = vld [vmem:[%s1 + $0x8] sm:$0xff]
        %v181 = vld [vmem:[%s1 + $0x10] sm:$0xff]
        %v182 = vld [vmem:[%s1 + $0x18] sm:$0xff]
        %v183 = vld [vmem:[%s1 + $0x20] sm:$0xff]
        %v184 = vld [vmem:[%s1 + $0x28] sm:$0xff]
        %v185 = vld [vmem:[%s1 + $0x30] sm:$0xff]
        %v186 = vld [vmem:[%s1 + $0x38] sm:$0xff]
        %v187 = vpack.c.bf16 %v180, %v179
        %v188 = vpack.c.bf16 %v182, %v181
        %v189 = vpack.c.bf16 %v184, %v183
        %v190 = vpack.c.bf16 %v186, %v185
        %vm191 = vcmask 261120
        %v193 = vsel %vm191, %v177, 0
        %v196 = vsel %vm191, %v178, 0
        %v199 = vsel %vm191, %v187, 0
        %v202 = vsel %vm191, %v188, 0
        %v205 = vsel %vm191, %v189, 0
        %v208 = vsel %vm191, %v190, 0
        %210 = vmatprep.subr.bf16.mxu0 0
        %211 = vmatpush1.bf16.xpose.msra.mxu0 %v199
        %212 = vmatprep.subr.bf16.mxu0 0
        %213 = vmatpush1.bf16.xpose.msra.mxu0 %v202
        %214 = vmatprep.subr.bf16.mxu0 0
        %215 = vmatpush1.bf16.xpose.msra.mxu0 %v205
        %216 = vmatprep.subr.bf16.mxu0 0
        %217 = vmatpush1.bf16.xpose.msra.mxu0 %v208
        %218 = vmatprep.subr.bf16.mxu0 0
        %219 = vmatpush1.bf16.xpose.msra.mxu0 0
        %220 = vmatprep.subr.bf16.mxu0 0
        %221 = vmatpush1.bf16.xpose.msra.mxu0 0
        %222 = vmatprep.subr.bf16.mxu0 0
        %223 = vmatpush1.bf16.xpose.msra.mxu0 0
        %224 = vmatprep.subr.bf16.mxu0 0
        %225 = vmatpush1.bf16.xpose.msra.mxu0 0
        %226 = vmatprep.subr.bf16.mxu0 0
        %227 = vmatpush1.bf16.xpose.msra.mxu0 0
        %228 = vmatprep.subr.bf16.mxu0 0
        %229 = vmatpush1.bf16.xpose.msra.mxu0 0
        %230 = vmatprep.subr.bf16.mxu0 0
        %231 = vmatpush1.bf16.xpose.msra.mxu0 0
        %232 = vmatprep.subr.bf16.mxu0 0
        %233 = vmatpush1.bf16.xpose.msra.mxu0 0
        %234 = vmatprep.subr.bf16.mxu0 0
        %235 = vmatpush1.bf16.xpose.msra.mxu0 0
        %236 = vmatprep.subr.bf16.mxu0 0
        %237 = vmatpush1.bf16.xpose.msra.mxu0 0
        %238 = vmatprep.subr.bf16.mxu0 0
        %239 = vmatpush1.bf16.xpose.msra.mxu0 0
        %240 = vmatprep.subr.bf16.mxu0 0
        %241 = vmatpush1.bf16.xpose.msra.mxu0 0
        %242 = vmatprep.mubr.bf16.mxu0 0
        %243 = vmatmul.mubr.bf16.gmra.mrb[0].mxu0 %v193
        %v244 = vpop.f32.mrb[0].mxu0
        %v245 = vadd.f32 0.0, %v244
        %v246 = vpop.f32.mrb[0].mxu0
        %v247 = vpop.f32.mrb[0].mxu0
        %v248 = vadd.f32 0.0, %v247
        %v249 = vpop.f32.mrb[0].mxu0
        %250 = vmatprep.mubr.bf16.mxu0 0
        %251 = vmatmul.mubr.bf16.gmra.mrb[0].mxu0 %v196
        %v252 = vpop.f32.mrb[0].mxu0
        %v253 = vadd.f32 0.0, %v252
        %v254 = vpop.f32.mrb[0].mxu0
        %v255 = vpop.f32.mrb[0].mxu0
        %v256 = vadd.f32 0.0, %v255
        %v257 = vpop.f32.mrb[0].mxu0
        %258 = vdwg.mxu0
        %v259 = vmul.f32 %v245, 0.25
        %v260 = vmul.f32 %v248, 0.25
        %v261 = vmul.f32 %v253, 0.25
        %v262 = vmul.f32 %v256, 0.25
        %v263 = vld [vmem:[%s2] sm:$0x1]
        %v265 = vlaneseq
        %v266 = vshrl.u32 %v265, 7
        %v267 = vsub.s32 0, %v266
        %v268 = vrot.slane %v263, %v267
        %v270 = vadd.f32 %v259, %v268
        %v271 = vadd.f32 %v260, %v268
        %v272 = vadd.f32 %v261, %v268
        %v273 = vadd.f32 %v262, %v268
        %vm274 = vcmask 523264
        %275 = vst.msk [vmem:[%s164] sm:$0xff] %vm274, %v270
        %276 = vst.msk [vmem:[%s164 + $0x8] sm:$0xff] %vm274, %v271
        %277 = vst.msk [vmem:[%s164 + $0x10] sm:$0xff] %vm274, %v272
        %278 = vst.msk [vmem:[%s164 + $0x18] sm:$0xff] %vm274, %v273
        %s279 = sand.u32 %s93, 1
        %s280 = scalar_lea.sflag [#allocation3], %s279
        %s281 = sand.u32 %s93, 1
        %s282 = smul.addr %s281, 32
        %s283 = scalar_lea.vmem [#allocation2], %s282
        // Predicated region
        $region33: #{tpu_custom_call.1} parent=31 // pred_check
          %p284 = pneg %p103
        $region34: #{tpu_custom_call.1} parent=31 // pred_check_branch
          %286 = sbr.rel (%p284) target = $region36
        $region35: #{tpu_custom_call.1} parent=31 // pred_region
          %s287 = smul.u32 4, %s17
          %s289 = ssub.s32 512, 512
          %290 = vsyncadd %s280, %s289
          %s291 = smul.addr %s287, 128
          %s292 = scalar_lea.hbm %s3, %s291
          %s293 = sshll.u32 %s283, 4
          %s294 = int_to_ptr.vmem [resolvable:$true] %s293
          %299 = dma.vmem_to_hbm [thread:$0]  %s294, 512, %s292, %s280, 128, 128, 8
        $region36: #{tpu_custom_call.1} parent=31 // pred_fallthru
          _
      $region32: #{tpu_custom_call.1} parent=5 // pred_fallthru
        _
      %p300 = scmp.le.s32.totalorder 2, %s12
      // Predicated region
      $region37: #{tpu_custom_call.1} parent=5 // pred_check
        %p301 = pneg %p300
      $region38: #{tpu_custom_call.1} parent=5 // pred_check_branch
        %303 = sbr.rel (%p301) target = $region40
      $region39: #{tpu_custom_call.1} parent=5 // pred_region
        %s304 = ssub.s32 %s12, 2
        // Predicated region
        $region41: #{tpu_custom_call.1} parent=39 // pred_check
          %p305 = pneg %p109
        $region42: #{tpu_custom_call.1} parent=39 // pred_check_branch
          %307 = sbr.rel (%p305) target = $region44
        $region43: #{tpu_custom_call.1} parent=39 // pred_region
          %s308 = sand.u32 %s94, 1
          %s309 = scalar_lea.sflag [#allocation3], %s308
          %s310 = sand.u32 %s94, 1
          %s311 = smul.addr %s310, 32
          %s312 = scalar_lea.vmem [#allocation2], %s311
          %313 = dma.done %s309, 512
        $region44: #{tpu_custom_call.1} parent=39 // pred_fallthru
          _
      $region40: #{tpu_custom_call.1} parent=5 // pred_fallthru
        _
    $region6: #{tpu_custom_call.1} parent=1 // loop_footer
      %s16 = sadd.s32 1, %s12
    $region7: #{tpu_custom_call.1} parent=1 // loop_footer_branch
      %11 = sbr.rel target = $region3
    $region8: #{tpu_custom_call.1} parent=1 // loop_exit
      _
    %314 = vsyncpa [#allocation3], 1
    %s315 = scalar_lea.sflag [#allocation3], 1
    %316 = vsyncpa %s315, 1

</llo_original>
